<compile_context>
chip_gen: v7x
topology: tpu7x:2x2x1
jax: 0.10.0
libtpu: 0.0.40
codegen_flags: <defaults>
</compile_context>

<pallas_src>
import jax
import jax.numpy as jnp
from jax import lax
from jax.experimental import pallas as pl
from jax.experimental.pallas import tpu as pltpu

_LANE = 128
# 1024x128 f32 block = 512 KiB.
_MAX_BLOCK_ROWS = 1024


def _make_kernel(block_rows, rows_total, blocks_per_split, needs_mask):
    def kernel(p_ref, t_ref, o_ref, acc_ref):
        c = pl.program_id(0)   # core/split axis ("parallel")
        i = pl.program_id(1)   # reduction axis ("arbitrary")

        @pl.when(i == 0)
        def _():
            acc_ref[...] = jnp.zeros_like(acc_ref)

        d = p_ref[...].astype(jnp.float32) - t_ref[...].astype(jnp.float32)
        sq = d * d

        if needs_mask:
            # Global row ids covered by this (possibly overhanging / clamped)
            # block.  Rows >= rows_total are masked so unspecified padding the
            # pipeline may have loaded never reaches the accumulator, and a
            # clamped duplicate block contributes exactly zero.
            blk = c * blocks_per_split + i
            row_ids = (lax.broadcasted_iota(jnp.int32, (block_rows, _LANE), 0)
                       + blk * block_rows)
            sq = jnp.where(row_ids < rows_total, sq, 0.0)

        # Pure VPU elementwise accumulate; defer the cross-lane reduce.
        acc_ref[...] += sq

        @pl.when(i == pl.num_programs(1) - 1)
        def _():
            s = jnp.sum(acc_ref[...])   # single XLU reduce per split
            o_ref[...] = jnp.broadcast_to(s, o_ref.shape).astype(o_ref.dtype)

    return kernel


def euclidean_distance(pred, target):
    """Pallas equivalent of EuclideanDistance.forward(pred, target)."""
    assert pred.shape == target.shape, "pred/target must have the same shape"
    pf = pred.reshape(-1)
    tf = target.reshape(-1)
    n = pf.shape[0]

    # Lane-major (rows, 128) view.  For lane-aligned sizes (the common case)
    # this is a metadata-only reshape -- no extra HBM traffic.  Only a ragged
    # tail of < 128 elements forces a pad (zeros contribute 0 to the sum).
    rem = n % _LANE
    if rem:
        pf = jnp.pad(pf, (0, _LANE - rem))
        tf = jnp.pad(tf, (0, _LANE - rem))
    rows_total = pf.shape[0] // _LANE
    pf = pf.reshape(rows_total, _LANE)
    tf = tf.reshape(rows_total, _LANE)

    # Block rows: either the full row extent (always a legal block) or the max
    # block size (multiple of 8/16); ragged last block is masked in-kernel.
    block_rows = min(_MAX_BLOCK_ROWS, rows_total)
    num_blocks = pl.cdiv(rows_total, block_rows)
    num_splits = min(2, num_blocks)            # use both TensorCores on v7x
    blocks_per_split = pl.cdiv(num_blocks, num_splits)

    # Masking only needed for a ragged last block or an uneven split (which
    # creates a clamped duplicate block); otherwise run the unmasked path.
    needs_mask = (rows_total % block_rows != 0) or \
                 (num_blocks % num_splits != 0)

    def in_map(c, i):
        # Clamp so the (rare) extra iteration of an uneven split stays in
        # bounds; its contribution is masked to zero inside the kernel.
        return (jnp.minimum(c * blocks_per_split + i, num_blocks - 1), 0)

    kernel = _make_kernel(block_rows, rows_total, blocks_per_split, needs_mask)

    out = pl.pallas_call(
        kernel,
        out_shape=jax.ShapeDtypeStruct((num_splits, 8, _LANE), jnp.float32),
        grid_spec=pltpu.PrefetchScalarGridSpec(
            num_scalar_prefetch=0,
            grid=(num_splits, blocks_per_split),
            in_specs=[
                pl.BlockSpec((block_rows, _LANE), in_map),
                pl.BlockSpec((block_rows, _LANE), in_map),
            ],
            out_specs=pl.BlockSpec((1, 8, _LANE), lambda c, i: (c, 0, 0)),
            scratch_shapes=[pltpu.VMEM((block_rows, _LANE), jnp.float32)],
        ),
        compiler_params=pltpu.CompilerParams(
            dimension_semantics=("parallel", "arbitrary")),
    )(pf, tf)

    # Each split wrote its partial sum-of-squares broadcast over its (8,128)
    # output slab; combine partials and take sqrt (mean of a scalar = identity).
    return jnp.sqrt(jnp.sum(out[:, 0, 0]))


def _ref(pred, target):
    return jnp.sqrt(jnp.sum((pred.astype(jnp.float32)
                             - target.astype(jnp.float32)) ** 2))


if __name__ == "__main__":
    key = jax.random.PRNGKey(0)

    # 1) Small NCHW-style input (the spec's typical use); single-block path.
    k1, k2, key = (*jax.random.split(key, 2), key)
    pred = jax.random.normal(k1, (2, 4, 16, 16), dtype=jnp.float32)
    target = jax.random.normal(k2, (2, 4, 16, 16), dtype=jnp.float32)
    res = jax.block_until_ready(euclidean_distance(pred, target))
    assert jnp.allclose(res, _ref(pred, target), rtol=1e-4, atol=1e-5), res

    # 2) Multi-block case exercising the 2-way split (2048 rows of 128),
    #    unmasked fast path.
    k3, k4, key = (*jax.random.split(key, 2), key)
    p2 = jax.random.normal(k3, (4, 16, 64, 64), dtype=jnp.float32)
    t2 = jax.random.normal(k4, (4, 16, 64, 64), dtype=jnp.float32)
    res2 = jax.block_until_ready(euclidean_distance(p2, t2))
    assert jnp.allclose(res2, _ref(p2, t2), rtol=1e-4, atol=1e-4), res2

    # 3) Ragged size: odd block count (clamped duplicate block) + lane-pad
    #    tail; masked path.
    k5, k6 = jax.random.split(key)
    p3 = jax.random.normal(k5, (268837,), dtype=jnp.float32)
    t3 = jax.random.normal(k6, (268837,), dtype=jnp.float32)
    res3 = jax.block_until_ready(euclidean_distance(p3, t3))
    assert jnp.allclose(res3, _ref(p3, t3), rtol=1e-4, atol=1e-4), res3

    print("KERNEL_OK")
</pallas_src>

<mosaic_0001>
module attributes {stable_mosaic.version = 11 : i64} {
  func.func @kernel(%arg0: i32, %arg1: i32, %arg2: memref<16x128xf32, #tpu.memory_space<vmem>>, %arg3: memref<16x128xf32, #tpu.memory_space<vmem>>, %arg4: memref<1x8x128xf32, #tpu.memory_space<vmem>>, %arg5: memref<16x128xf32, #tpu.memory_space<vmem>>) attributes {dimension_semantics = [#tpu.dimension_semantics<parallel>, #tpu.dimension_semantics<arbitrary>], iteration_bounds = array<i64: 1, 1>, scalar_prefetch = 0 : i64, scratch_operands = 1 : i64, tpu.core_type = #tpu.core_type<tc>, window_params = [{transform_indices = @transform_0, window_bounds = array<i64: 16, 128>}, {transform_indices = @transform_1, window_bounds = array<i64: 16, 128>}, {transform_indices = @transform_2, window_bounds = array<i64: 1, 8, 128>}]} {
    %c0_i32 = arith.constant 0 : i32
    %0 = arith.cmpi eq, %arg1, %c0_i32 : i32
    %1 = arith.extui %0 : i1 to i32
    %c0_i32_0 = arith.constant 0 : i32
    %2 = arith.cmpi ne, %1, %c0_i32_0 : i32
    scf.if %2 {
      %cst = arith.constant 0.000000e+00 : f32
      %13 = vector.broadcast %cst : f32 to vector<16x128xf32>
      %c0_10 = arith.constant 0 : index
      %c0_11 = arith.constant 0 : index
      %14 = vector.load %arg5[%c0_10, %c0_11] : memref<16x128xf32, #tpu.memory_space<vmem>>, vector<16x128xf32>
      tpu.vector_store %arg5[%c0_10, %c0_11], %13 {strides = array<i32>} : memref<16x128xf32, #tpu.memory_space<vmem>>, vector<16x128xf32>,
    } else {
    }
    %c0 = arith.constant 0 : index
    %c0_1 = arith.constant 0 : index
    %3 = vector.load %arg2[%c0, %c0_1] : memref<16x128xf32, #tpu.memory_space<vmem>>, vector<16x128xf32>
    %c0_2 = arith.constant 0 : index
    %c0_3 = arith.constant 0 : index
    %4 = vector.load %arg3[%c0_2, %c0_3] : memref<16x128xf32, #tpu.memory_space<vmem>>, vector<16x128xf32>
    %5 = arith.subf %3, %4 : vector<16x128xf32>
    %6 = arith.mulf %5, %5 : vector<16x128xf32>
    %c0_4 = arith.constant 0 : index
    %c0_5 = arith.constant 0 : index
    %7 = vector.load %arg5[%c0_4, %c0_5] : memref<16x128xf32, #tpu.memory_space<vmem>>, vector<16x128xf32>
    %8 = arith.addf %7, %6 : vector<16x128xf32>
    %c0_6 = arith.constant 0 : index
    %c0_7 = arith.constant 0 : index
    %9 = vector.load %arg5[%c0_6, %c0_7] : memref<16x128xf32, #tpu.memory_space<vmem>>, vector<16x128xf32>
    tpu.vector_store %arg5[%c0_6, %c0_7], %8 {strides = array<i32>} : memref<16x128xf32, #tpu.memory_space<vmem>>, vector<16x128xf32>,
    %c0_i32_8 = arith.constant 0 : i32
    %10 = arith.cmpi eq, %arg1, %c0_i32_8 : i32
    %11 = arith.extui %10 : i1 to i32
    %c0_i32_9 = arith.constant 0 : i32
    %12 = arith.cmpi ne, %11, %c0_i32_9 : i32
    scf.if %12 {
      %c0_10 = arith.constant 0 : index
      %c0_11 = arith.constant 0 : index
      %13 = vector.load %arg5[%c0_10, %c0_11] : memref<16x128xf32, #tpu.memory_space<vmem>>, vector<16x128xf32>
      %14 = vector.shape_cast %13 : vector<16x128xf32> to vector<1x16x128xf32>
      %cst = arith.constant dense<0.000000e+00> : vector<1xf32>
      %15 = vector.multi_reduction <add>, %14, %cst [1, 2] : vector<1x16x128xf32> to vector<1xf32>
      %16 = vector.shape_cast %15 : vector<1xf32> to vector<1x1x1xf32>
      %17 = vector.extract %16[0, 0, 0] : f32 from vector<1x1x1xf32>
      %18 = vector.broadcast %17 : f32 to vector<1x8x128xf32>
      %c0_12 = arith.constant 0 : index
      %c0_13 = arith.constant 0 : index
      %c0_14 = arith.constant 0 : index
      %19 = vector.load %arg4[%c0_12, %c0_13, %c0_14] : memref<1x8x128xf32, #tpu.memory_space<vmem>>, vector<1x8x128xf32>
      tpu.vector_store %arg4[%c0_12, %c0_13, %c0_14], %18 {strides = array<i32>} : memref<1x8x128xf32, #tpu.memory_space<vmem>>, vector<1x8x128xf32>,
    } else {
    }
    return
  }
  func.func @transform_0(%arg0: i32, %arg1: i32) -> (i32, i32) {
    %c1_i32 = arith.constant 1 : i32
    %0 = arith.muli %arg0, %c1_i32 : i32
    %1 = arith.addi %0, %arg1 : i32
    %c0_i32 = arith.constant 0 : i32
    %2 = arith.minsi %1, %c0_i32 : i32
    %c0_i32_0 = arith.constant 0 : i32
    %c0_i32_1 = arith.constant 0 : i32
    return %2, %c0_i32_0 : i32, i32
  }
  func.func @transform_1(%arg0: i32, %arg1: i32) -> (i32, i32) {
    %c1_i32 = arith.constant 1 : i32
    %0 = arith.muli %arg0, %c1_i32 : i32
    %1 = arith.addi %0, %arg1 : i32
    %c0_i32 = arith.constant 0 : i32
    %2 = arith.minsi %1, %c0_i32 : i32
    %c0_i32_0 = arith.constant 0 : i32
    %c0_i32_1 = arith.constant 0 : i32
    return %2, %c0_i32_0 : i32, i32
  }
  func.func @transform_2(%arg0: i32, %arg1: i32) -> (i32, i32, i32) {
    %c0_i32 = arith.constant 0 : i32
    %c0_i32_0 = arith.constant 0 : i32
    %c0_i32_1 = arith.constant 0 : i32
    return %arg0, %c0_i32, %c0_i32_0 : i32, i32, i32
  }
}

</mosaic_0001>

<llo_original>
// kernel: tpu_custom_call.1
$region0: #{tpu_custom_call.1}
  #allocation0 [shape = 'u32[]', space=smem, size = 0x4, offset = 0x4, fixed_abs, tag = 'smem constant byte address 0x4 - core index']
  #allocation1 [shape = 'u32[144,128]{1,0:T(1,128)}', space=vmem, size = 0x12000, scoped, tag = 'internal scratch']
  #allocation2 [shape = 'f32[16,128]{1,0:T(8,128)}', space=vmem, size = 0x2000, scoped, tag = 'scratch operand']
  %s0 = inlined_call_operand.hbm [shape: f32[16,128], index: 0, kind: input, shape index: {}]
  %s1 = inlined_call_operand.hbm [shape: f32[16,128], index: 1, kind: input, shape index: {}]
  %s2 = inlined_call_operand.hbm [shape: f32[1,8,128], index: 2, kind: output, shape index: {}]
  %s3 = sld [smem:[#allocation0]]
  $region34: #{tpu_custom_call.1} parent=0
    _
  %s5 = ssub.s32 1, %s3
  %s6 = scalar_select 0, %s5, %s3
  $region1: #{tpu_custom_call.1} parent=0
    #allocation3 [shape = 'u8[8192]{0}', space=vmem, size = 0x2000, scoped, tag = 'input window, operand 0, single buffered']
    #allocation4 [shape = 's32[1]{0}', space=sflag, size = 0x4, scoped, tag = 'scoped memory for tpu_custom_call.1']
    #allocation5 [shape = 's32[1]{0}', space=sflag, size = 0x4, scoped, tag = 'scoped memory for tpu_custom_call.1']
    #allocation6 [shape = 'u8[8192]{0}', space=vmem, size = 0x2000, scoped, tag = 'input window, operand 1, single buffered']
    #allocation7 [shape = 's32[1]{0}', space=sflag, size = 0x4, scoped, tag = 'scoped memory for tpu_custom_call.1']
    #allocation8 [shape = 'u8[4096]{0}', space=vmem, size = 0x1000, scoped, tag = 'output window, operand 0, single buffered']
    %7 = vsyncpa [#allocation4], 0
    %8 = vsyncpa [#allocation7], 0
    %9 = vsyncpa [#allocation5], 0
    // Predicated region
    $region2: #{tpu_custom_call.1} parent=1 // pred_check
      _
    $region3: #{tpu_custom_call.1} parent=1 // pred_check_branch
      %11 = sbr.rel (0) target = $region5
    $region4: #{tpu_custom_call.1} parent=1 // pred_region
      %s12 = sadd.s32 0, 0
      %p13 = scmp.lt.s32.totalorder %s12, 0
      %s14 = scalar_select %p13, %s12, 0
      %s15 = smul.u32 2, %s14
      %s17 = ssub.s32 256, 256
      %18 = vsyncadd [#allocation4], %s17
      %s19 = smul.addr %s15, 128
      %s20 = scalar_lea.hbm %s0, %s19
      %s21 = sshll.u32 [#allocation3], 4
      %s22 = int_to_ptr.vmem [resolvable:$true] %s21
      %27 = dma.hbm_to_vmem [thread:$0]  %s20, 256, %s22, [#allocation4], 128, 128, 8
    $region5: #{tpu_custom_call.1} parent=1 // pred_fallthru
      _
    // Predicated region
    $region6: #{tpu_custom_call.1} parent=1 // pred_check
      _
    $region7: #{tpu_custom_call.1} parent=1 // pred_check_branch
      %29 = sbr.rel (0) target = $region9
    $region8: #{tpu_custom_call.1} parent=1 // pred_region
      %s30 = sadd.s32 0, 0
      %p31 = scmp.lt.s32.totalorder %s30, 0
      %s32 = scalar_select %p31, %s30, 0
      %s33 = smul.u32 2, %s32
      %s35 = ssub.s32 256, 256
      %36 = vsyncadd [#allocation7], %s35
      %s37 = smul.addr %s33, 128
      %s38 = scalar_lea.hbm %s1, %s37
      %s39 = sshll.u32 [#allocation6], 4
      %s40 = int_to_ptr.vmem [resolvable:$true] %s39
      %45 = dma.hbm_to_vmem [thread:$0]  %s38, 256, %s40, [#allocation7], 128, 128, 8
    $region9: #{tpu_custom_call.1} parent=1 // pred_fallthru
      _
    // Predicated region
    $region10: #{tpu_custom_call.1} parent=1 // pred_check
      _
    $region11: #{tpu_custom_call.1} parent=1 // pred_check_branch
      %47 = sbr.rel (0) target = $region13
    $region12: #{tpu_custom_call.1} parent=1 // pred_region
      %48 = dma.done [#allocation4], 256
    $region13: #{tpu_custom_call.1} parent=1 // pred_fallthru
      _
    // Predicated region
    $region14: #{tpu_custom_call.1} parent=1 // pred_check
      _
    $region15: #{tpu_custom_call.1} parent=1 // pred_check_branch
      %50 = sbr.rel (0) target = $region17
    $region16: #{tpu_custom_call.1} parent=1 // pred_region
      %51 = dma.done [#allocation7], 256
    $region17: #{tpu_custom_call.1} parent=1 // pred_fallthru
      _
    %s52 = sadd.s32 0, 0
    %p53 = scmp.lt.s32.totalorder %s52, 0
    %s54 = scalar_select %p53, %s52, 0
    %s55 = smul.u32 2, %s54
    %s56 = sadd.s32 0, 0
    %p57 = scmp.lt.s32.totalorder %s56, 0
    %s58 = scalar_select %p57, %s56, 0
    %s59 = smul.u32 2, %s58
    %p60 = scmp.eq.s32.totalorder 0, 0
    // Predicated region
    $region18: #{tpu_custom_call.1} parent=1 // pred_check
      %p61 = pneg %p60
    $region19: #{tpu_custom_call.1} parent=1 // pred_check_branch
      %63 = sbr.rel (%p61) target = $region21
    $region20: #{tpu_custom_call.1} parent=1 // pred_region
      %64 = vst [vmem:[#allocation2] sm:$0xff] 0.0
      %65 = vst [vmem:[#allocation2 + $0x8] sm:$0xff] 0.0
    $region21: #{tpu_custom_call.1} parent=1 // pred_fallthru
      _
    %v66 = vld [vmem:[#allocation3] sm:$0xff]
    %v67 = vld [vmem:[#allocation3 + $0x8] sm:$0xff]
    %v68 = vld [vmem:[#allocation6] sm:$0xff]
    %v69 = vld [vmem:[#allocation6 + $0x8] sm:$0xff]
    %v70 = vsub.f32 %v66, %v68
    %v71 = vsub.f32 %v67, %v69
    %v72 = vmul.f32 %v70, %v70
    %v73 = vmul.f32 %v71, %v71
    %v74 = vld [vmem:[#allocation2] sm:$0xff]
    %v75 = vld [vmem:[#allocation2 + $0x8] sm:$0xff]
    %v76 = vadd.f32 %v74, %v72
    %v77 = vadd.f32 %v75, %v73
    %78 = vst [vmem:[#allocation2] sm:$0xff] %v76
    %79 = vst [vmem:[#allocation2 + $0x8] sm:$0xff] %v77
    // Predicated region
    $region22: #{tpu_custom_call.1} parent=1 // pred_check
      %p80 = pneg %p60
    $region23: #{tpu_custom_call.1} parent=1 // pred_check_branch
      %82 = sbr.rel (%p80) target = $region25
    $region24: #{tpu_custom_call.1} parent=1 // pred_region
      %v83 = vld [vmem:[#allocation2] sm:$0xff]
      %v84 = vld [vmem:[#allocation2 + $0x8] sm:$0xff]
      %v85 = vadd.f32 %v83, %v84
      %86 = vadd.xlane.f32.xlu0 %v85
      %v87 = vpop.xlane.xlu0 %86
      %v88 = vrot.slane %v87, 4
      %v89 = vadd.f32 %v87, %v88
      %v90 = vrot.slane %v89, 2
      %v91 = vadd.f32 %v89, %v90
      %v92 = vrot.slane %v91, 1
      %v93 = vadd.f32 %v91, %v92
      %s94 = vtos %v93
      %v95 = vstv %s94
      %96 = vst [vmem:[#allocation8] sm:$0xff] %v95
    $region25: #{tpu_custom_call.1} parent=1 // pred_fallthru
      _
    // Predicated region
    $region26: #{tpu_custom_call.1} parent=1 // pred_check
      _
    $region27: #{tpu_custom_call.1} parent=1 // pred_check_branch
      %98 = sbr.rel (0) target = $region29
    $region28: #{tpu_custom_call.1} parent=1 // pred_region
      %s100 = ssub.s32 128, 128
      %101 = vsyncadd [#allocation5], %s100
      %s103 = sshll.u32 [#allocation8], 4
      %s104 = int_to_ptr.vmem [resolvable:$true] %s103
      %106 = dma.vmem_to_hbm [thread:$0]  %s104, 128, %s2, [#allocation5]
    $region29: #{tpu_custom_call.1} parent=1 // pred_fallthru
      _
    // Predicated region
    $region30: #{tpu_custom_call.1} parent=1 // pred_check
      _
    $region31: #{tpu_custom_call.1} parent=1 // pred_check_branch
      %108 = sbr.rel (0) target = $region33
    $region32: #{tpu_custom_call.1} parent=1 // pred_region
      %109 = dma.done [#allocation5], 128
    $region33: #{tpu_custom_call.1} parent=1 // pred_fallthru
      _
    %110 = vsyncpa [#allocation4], 1
    %111 = vsyncpa [#allocation7], 1
    %112 = vsyncpa [#allocation5], 1

</llo_original>
